<compile_context>
chip_gen: v5e
topology: v5e:2x2
jax: 0.10.0
libtpu: 0.0.40
codegen_flags: <defaults>
</compile_context>

<pallas_src>
import functools

import jax
import jax.numpy as jnp
from jax.experimental import pallas as pl
from jax.experimental.pallas import tpu as pltpu


def _round_up(x, m):
    return (x + m - 1) // m * m


def _vmem_capacity_bytes():
    try:
        info = pltpu.get_tpu_info()
        cap = int(getattr(info, "vmem_capacity_bytes", 0) or 0)
        if cap > 0:
            return cap
    except Exception:
        pass
    return 64 << 20  # conservative (v7x per-TensorCore)


def _footprint_bytes(tm, tn, tk, cbytes, obytes, with_acc):
    fp = (2 * tm * tk * cbytes       # x tile, double-buffered
          + 2 * tk * tn * cbytes     # weight tile, double-buffered
          + 2 * tn * 4               # bias tile (f32), double-buffered
          + 2 * tm * tn * obytes)    # output tile, double-buffered
    if with_acc:
        fp += tm * tn * 4            # f32 accumulator scratch
    return fp


def _linear_relu_kernel_f32(x_ref, w_ref, b_ref, o_ref):
    """f32 output: accumulate directly into the resident output tile."""
    k = pl.program_id(2)

    @pl.when(k == 0)
    def _():
        o_ref[...] = jnp.zeros_like(o_ref)

    o_ref[...] += jnp.dot(x_ref[...], w_ref[...],
                          preferred_element_type=jnp.float32)

    @pl.when(k == pl.num_programs(2) - 1)
    def _():
        o_ref[...] = jnp.maximum(o_ref[...] + b_ref[...], 0.0)


def _linear_relu_kernel_acc(x_ref, w_ref, b_ref, o_ref, acc_ref):
    """Non-f32 output: f32 scratch accumulator, cast on finalize."""
    k = pl.program_id(2)

    @pl.when(k == 0)
    def _():
        acc_ref[...] = jnp.zeros_like(acc_ref)

    acc_ref[...] += jnp.dot(x_ref[...], w_ref[...],
                            preferred_element_type=jnp.float32)

    @pl.when(k == pl.num_programs(2) - 1)
    def _():
        o_ref[...] = jnp.maximum(acc_ref[...] + b_ref[...], 0.0).astype(o_ref.dtype)


@functools.partial(jax.jit,
                   static_argnames=("block_m", "block_n", "block_k", "compute_dtype"))
def lin_w_activation(x, w_t, b, *, block_m=None, block_n=None, block_k=None,
                     compute_dtype=jnp.bfloat16):
    """ReLU(x @ w_t + b) via a tiled Pallas TPU kernel.

    x   : (M, in_features)
    w_t : (in_features, out_features)   (PyTorch weight transposed)
    b   : (out_features,)
    """
    M, K = x.shape
    Kw, N = w_t.shape
    assert K == Kw, "in_features mismatch"
    out_dtype = x.dtype
    cdtype = jnp.dtype(compute_dtype)
    cbytes = cdtype.itemsize
    obytes = jnp.dtype(out_dtype).itemsize

    use_direct = out_dtype == jnp.float32
    with_acc = not use_direct

    sub = 16 if cbytes == 2 else 8
    lane = 128

    M_hw = _round_up(M, sub)
    N_hw = _round_up(N, lane)
    K_hw = _round_up(K, lane)

    vmem_cap = _vmem_capacity_bytes()
    vmem_budget = int(vmem_cap * 0.80)      # leave headroom for internal scratch

    # ---- Tile selection -----------------------------------------------------
    if vmem_cap >= (96 << 20):               # v5e / v6e class (128 MiB VMEM)
        tm_t, tn_t, tk_t = 512, 1024, 1024
    else:                                    # v7x class (64 MiB per TensorCore)
        tm_t, tn_t, tk_t = 768, 768, 1024

    auto = block_m is None and block_n is None and block_k is None
    if block_m is not None:
        tm_t = _round_up(int(block_m), sub)
    if block_n is not None:
        tn_t = _round_up(int(block_n), lane)
    if block_k is not None:
        tk_t = _round_up(int(block_k), lane)

    tm = min(tm_t, M_hw)
    tn = min(tn_t, N_hw)
    tk = min(tk_t, K_hw)

    if auto:
        # Small-M (decode / GEMV-like): single M tile, wide N/K tiles so each
        # grid step moves a large contiguous weight slab (HBM-bound regime).
        if M_hw <= 128:
            tm = M_hw
            tn = min(max(tn, 1024), N_hw)
            tk = min(max(tk, 2048), K_hw)
        # Weight-resident fast path: weight is DMA'd from HBM exactly once.
        w_bytes = K_hw * N_hw * cbytes
        if w_bytes <= min(vmem_budget // 3, 24 << 20):
            if _footprint_bytes(tm, N_hw, K_hw, cbytes, obytes, with_acc) <= vmem_budget:
                tn, tk = N_hw, K_hw
        # Keep >=2 parallel programs when cheap (v7x megacore sharding).
        if tm >= M_hw and tn >= N_hw and N_hw >= 256 and N_hw % 256 == 0:
            tn = N_hw // 2

    # Shrink-to-fit under the VMEM budget (tk first: preserves tm*tn/(tm+tn)).
    while _footprint_bytes(tm, tn, tk, cbytes, obytes, with_acc) > vmem_budget:
        if tk > lane:
            tk = _round_up(tk // 2, lane)
        elif tn > lane:
            tn = _round_up(tn // 2, lane)
        elif tm > sub:
            tm = _round_up(tm // 2, sub)
        else:
            break

    M_pad = _round_up(M, tm)
    N_pad = _round_up(N, tn)
    K_pad = _round_up(K, tk)

    # ---- Operand prep (skip no-op casts / pads) ------------------------------
    xp = x if x.dtype == cdtype else x.astype(cdtype)
    if (M_pad, K_pad) != (M, K):
        xp = jnp.pad(xp, ((0, M_pad - M), (0, K_pad - K)))
    wp = w_t if w_t.dtype == cdtype else w_t.astype(cdtype)
    if (K_pad, N_pad) != (K, N):
        wp = jnp.pad(wp, ((0, K_pad - K), (0, N_pad - N)))
    bp = b if b.dtype == jnp.float32 else b.astype(jnp.float32)
    if N_pad != N:
        bp = jnp.pad(bp, (0, N_pad - N))
    bp = bp.reshape(1, N_pad)

    grid = (M_pad // tm, N_pad // tn, K_pad // tk)

    footprint = _footprint_bytes(tm, tn, tk, cbytes, obytes, with_acc)
    vmem_limit = int(min(int(vmem_cap * 0.9),
                         max(footprint + (8 << 20), 32 << 20)))

    cost = pl.CostEstimate(
        flops=2 * M_pad * N_pad * K_pad,
        transcendentals=0,
        bytes_accessed=(M_pad * K_pad * cbytes * grid[1]     # x re-read per N tile
                        + K_pad * N_pad * cbytes * grid[0]   # w re-read per M tile
                        + N_pad * 4
                        + M_pad * N_pad * obytes),
    )

    kernel = _linear_relu_kernel_f32 if use_direct else _linear_relu_kernel_acc
    scratch = [] if use_direct else [pltpu.VMEM((tm, tn), jnp.float32)]

    out_padded = pl.pallas_call(
        kernel,
        out_shape=jax.ShapeDtypeStruct((M_pad, N_pad), out_dtype),
        grid_spec=pltpu.PrefetchScalarGridSpec(
            num_scalar_prefetch=0,
            grid=grid,
            in_specs=[
                pl.BlockSpec((tm, tk), lambda i, j, k: (i, k)),   # x tile
                pl.BlockSpec((tk, tn), lambda i, j, k: (k, j)),   # weight tile
                pl.BlockSpec((1, tn), lambda i, j, k: (0, j)),    # bias tile
            ],
            out_specs=pl.BlockSpec((tm, tn), lambda i, j, k: (i, j)),
            scratch_shapes=scratch,
        ),
        compiler_params=pltpu.CompilerParams(
            dimension_semantics=("parallel", "parallel", "arbitrary"),
            vmem_limit_bytes=vmem_limit,
        ),
        cost_estimate=cost,
    )(xp, wp, bp)

    if (M_pad, N_pad) != (M, N):
        out_padded = out_padded[:M, :N]
    return out_padded


def _reference(x, weight, bias, emulate_bf16):
    x = x.astype(jnp.float32)
    weight = weight.astype(jnp.float32)
    if emulate_bf16:
        x = x.astype(jnp.bfloat16).astype(jnp.float32)
        weight = weight.astype(jnp.bfloat16).astype(jnp.float32)
    return jnp.maximum(x @ weight.T + bias.astype(jnp.float32), 0.0)


if __name__ == "__main__":
    # LinWActivation(in_features=32, out_features=32) applied to x of shape (8, 32).
    in_features, out_features = 32, 32
    batch = 8

    key = jax.random.PRNGKey(0)
    kx, kw, kb = jax.random.split(key, 3)

    # Deterministic init mimicking nn.Linear's uniform(-1/sqrt(in), 1/sqrt(in)).
    bound = 1.0 / jnp.sqrt(jnp.float32(in_features))
    weight = jax.random.uniform(kw, (out_features, in_features), jnp.float32,
                                minval=-bound, maxval=bound)   # PyTorch layout [out, in]
    bias = jax.random.uniform(kb, (out_features,), jnp.float32,
                              minval=-bound, maxval=bound)
    x = jax.random.normal(kx, (batch, in_features), jnp.float32)

    out = lin_w_activation(x, weight.T, bias)
    out = jax.block_until_ready(out)
    assert out.shape == (batch, out_features)

    ref_bf16 = _reference(x, weight, bias, emulate_bf16=True)
    ref_f32 = _reference(x, weight, bias, emulate_bf16=False)
    assert jnp.allclose(out, ref_bf16, atol=1e-4, rtol=1e-4), "mismatch vs bf16 reference"
    assert jnp.allclose(out, ref_f32, atol=3e-2, rtol=3e-2), "mismatch vs f32 reference"

    # Ragged shape exercising padding and the multi-step M/N/K grid
    # (direct-into-output f32 accumulation path) with explicit small blocks.
    M2, K2, N2 = 48, 160, 200
    k2x, k2w, k2b = jax.random.split(jax.random.PRNGKey(1), 3)
    bound2 = 1.0 / jnp.sqrt(jnp.float32(K2))
    w2 = jax.random.uniform(k2w, (N2, K2), jnp.float32, minval=-bound2, maxval=bound2)
    b2 = jax.random.uniform(k2b, (N2,), jnp.float32, minval=-bound2, maxval=bound2)
    x2 = jax.random.normal(k2x, (M2, K2), jnp.float32)

    out2 = lin_w_activation(x2, w2.T, b2, block_m=16, block_n=128, block_k=128)
    out2 = jax.block_until_ready(out2)
    assert out2.shape == (M2, N2)
    ref2 = _reference(x2, w2, b2, emulate_bf16=True)
    assert jnp.allclose(out2, ref2, atol=2e-3, rtol=2e-3), "mismatch on ragged shape"

    # bf16 input/output path (scratch-accumulator kernel, pre-cast weight so the
    # wrapper skips the cast/pad passes on the weight).
    M3, K3, N3 = 24, 64, 48
    k3x, k3w, k3b = jax.random.split(jax.random.PRNGKey(2), 3)
    bound3 = 1.0 / jnp.sqrt(jnp.float32(K3))
    w3 = jax.random.uniform(k3w, (N3, K3), jnp.float32, minval=-bound3, maxval=bound3)
    b3 = jax.random.uniform(k3b, (N3,), jnp.float32, minval=-bound3, maxval=bound3)
    x3 = jax.random.normal(k3x, (M3, K3), jnp.float32).astype(jnp.bfloat16)

    out3 = lin_w_activation(x3, w3.T.astype(jnp.bfloat16), b3)
    out3 = jax.block_until_ready(out3)
    assert out3.shape == (M3, N3) and out3.dtype == jnp.bfloat16
    ref3 = _reference(x3, w3, b3, emulate_bf16=True)
    assert jnp.allclose(out3.astype(jnp.float32), ref3, atol=2e-2, rtol=2e-2), \
        "mismatch on bf16 output path"

    print("KERNEL_OK")
</pallas_src>

<mosaic_0001>
module attributes {stable_mosaic.version = 11 : i64} {
  func.func @_linear_relu_kernel_f32(%arg0: i32, %arg1: i32, %arg2: i32, %arg3: memref<16x128xbf16, #tpu.memory_space<vmem>>, %arg4: memref<128x128xbf16, #tpu.memory_space<vmem>>, %arg5: memref<1x128xf32, #tpu.memory_space<vmem>>, %arg6: memref<16x128xf32, #tpu.memory_space<vmem>>) attributes {dimension_semantics = [#tpu.dimension_semantics<parallel>, #tpu.dimension_semantics<parallel>, #tpu.dimension_semantics<arbitrary>], iteration_bounds = array<i64: 1, 1, 1>, scalar_prefetch = 0 : i64, scratch_operands = 0 : i64, tpu.core_type = #tpu.core_type<tc>, window_params = [{transform_indices = @transform_0, window_bounds = array<i64: 16, 128>}, {transform_indices = @transform_1, window_bounds = array<i64: 128, 128>}, {transform_indices = @transform_2, window_bounds = array<i64: 1, 128>}, {transform_indices = @transform_3, window_bounds = array<i64: 16, 128>}]} {
    %c0_i32 = arith.constant 0 : i32
    %0 = arith.cmpi eq, %arg2, %c0_i32 : i32
    %1 = arith.extui %0 : i1 to i32
    %c0_i32_0 = arith.constant 0 : i32
    %2 = arith.cmpi ne, %1, %c0_i32_0 : i32
    scf.if %2 {
      %cst_10 = arith.constant 0.000000e+00 : f32
      %12 = vector.broadcast %cst_10 : f32 to vector<16x128xf32>
      %c0_11 = arith.constant 0 : index
      %c0_12 = arith.constant 0 : index
      %13 = vector.load %arg6[%c0_11, %c0_12] : memref<16x128xf32, #tpu.memory_space<vmem>>, vector<16x128xf32>
      tpu.vector_store %arg6[%c0_11, %c0_12], %12 {strides = array<i32>} : memref<16x128xf32, #tpu.memory_space<vmem>>, vector<16x128xf32>,
    } else {
    }
    %c0 = arith.constant 0 : index
    %c0_1 = arith.constant 0 : index
    %3 = vector.load %arg6[%c0, %c0_1] : memref<16x128xf32, #tpu.memory_space<vmem>>, vector<16x128xf32>
    %c0_2 = arith.constant 0 : index
    %c0_3 = arith.constant 0 : index
    %4 = vector.load %arg3[%c0_2, %c0_3] : memref<16x128xbf16, #tpu.memory_space<vmem>>, vector<16x128xbf16>
    %c0_4 = arith.constant 0 : index
    %c0_5 = arith.constant 0 : index
    %5 = vector.load %arg4[%c0_4, %c0_5] : memref<128x128xbf16, #tpu.memory_space<vmem>>, vector<128x128xbf16>
    %cst = arith.constant dense<0.000000e+00> : vector<16x128xf32>
    %6 = tpu.matmul %4, %5, %cst {dimension_numbers = #tpu.dot_dimension_numbers<[1], [0], [0], [1], [0, 0, 1, 1], [], []>} : vector<16x128xbf16>, vector<128x128xbf16>, vector<16x128xf32> -> vector<16x128xf32>
    %7 = arith.addf %3, %6 : vector<16x128xf32>
    %c0_6 = arith.constant 0 : index
    %c0_7 = arith.constant 0 : index
    %8 = vector.load %arg6[%c0_6, %c0_7] : memref<16x128xf32, #tpu.memory_space<vmem>>, vector<16x128xf32>
    tpu.vector_store %arg6[%c0_6, %c0_7], %7 {strides = array<i32>} : memref<16x128xf32, #tpu.memory_space<vmem>>, vector<16x128xf32>,
    %c0_i32_8 = arith.constant 0 : i32
    %9 = arith.cmpi eq, %arg2, %c0_i32_8 : i32
    %10 = arith.extui %9 : i1 to i32
    %c0_i32_9 = arith.constant 0 : i32
    %11 = arith.cmpi ne, %10, %c0_i32_9 : i32
    scf.if %11 {
      %c0_10 = arith.constant 0 : index
      %c0_11 = arith.constant 0 : index
      %12 = vector.load %arg6[%c0_10, %c0_11] : memref<16x128xf32, #tpu.memory_space<vmem>>, vector<16x128xf32>
      %c0_12 = arith.constant 0 : index
      %c0_13 = arith.constant 0 : index
      %13 = vector.load %arg5[%c0_12, %c0_13] : memref<1x128xf32, #tpu.memory_space<vmem>>, vector<1x128xf32>
      %14 = vector.broadcast %13 : vector<1x128xf32> to vector<16x128xf32>
      %15 = arith.addf %12, %14 : vector<16x128xf32>
      %cst_14 = arith.constant 0.000000e+00 : f32
      %16 = vector.broadcast %cst_14 : f32 to vector<16x128xf32>
      %17 = arith.maximumf %15, %16 : vector<16x128xf32>
      %c0_15 = arith.constant 0 : index
      %c0_16 = arith.constant 0 : index
      %18 = vector.load %arg6[%c0_15, %c0_16] : memref<16x128xf32, #tpu.memory_space<vmem>>, vector<16x128xf32>
      tpu.vector_store %arg6[%c0_15, %c0_16], %17 {strides = array<i32>} : memref<16x128xf32, #tpu.memory_space<vmem>>, vector<16x128xf32>,
    } else {
    }
    return
  }
  func.func @transform_0(%arg0: i32, %arg1: i32, %arg2: i32) -> (i32, i32) {
    %c0_i32 = arith.constant 0 : i32
    return %arg0, %arg2 : i32, i32
  }
  func.func @transform_1(%arg0: i32, %arg1: i32, %arg2: i32) -> (i32, i32) {
    %c0_i32 = arith.constant 0 : i32
    return %arg2, %arg1 : i32, i32
  }
  func.func @transform_2(%arg0: i32, %arg1: i32, %arg2: i32) -> (i32, i32) {
    %c0_i32 = arith.constant 0 : i32
    %c0_i32_0 = arith.constant 0 : i32
    return %c0_i32, %arg1 : i32, i32
  }
  func.func @transform_3(%arg0: i32, %arg1: i32, %arg2: i32) -> (i32, i32) {
    %c0_i32 = arith.constant 0 : i32
    return %arg0, %arg1 : i32, i32
  }
}

</mosaic_0001>

<llo_original>
// kernel: lin_w_activation.1
$region0: #{lin_w_activation.1}
  #allocation0 [shape = 'u32[]', space=smem, size = 0x4, offset = 0x4, fixed_abs, tag = 'smem constant byte address 0x4 - core index']
  #allocation1 [shape = 'u32[72,128]{1,0:T(1,128)}', space=vmem, size = 0x9000, scoped, tag = 'internal scratch']
  %s0 = inlined_call_operand.vmem [shape: bf16[16,128], index: 0, kind: input, shape index: {}]
  %s1 = inlined_call_operand.vmem [shape: bf16[128,128], index: 1, kind: input, shape index: {}]
  %s2 = inlined_call_operand.vmem [shape: f32[1,128], index: 2, kind: input, shape index: {}]
  %s3 = inlined_call_operand.vmem [shape: f32[16,128], index: 3, kind: output, shape index: {}]
  %s4 = sld [smem:[#allocation0]]
  $region30: #{lin_w_activation.1} parent=0
    _
  %s6 = ssub.s32 1, %s4
  %s7 = scalar_select 0, %s6, %s4
  // Predicated region
  $region2: #{lin_w_activation.1} parent=0 // pred_check
    _
  $region3: #{lin_w_activation.1} parent=0 // pred_check_branch
    %9 = sbr.rel (0) target = $region5
  $region4: #{lin_w_activation.1} parent=0 // pred_region
    _
  $region5: #{lin_w_activation.1} parent=0 // pred_fallthru
    _
  // Predicated region
  $region6: #{lin_w_activation.1} parent=0 // pred_check
    _
  $region7: #{lin_w_activation.1} parent=0 // pred_check_branch
    %11 = sbr.rel (0) target = $region9
  $region8: #{lin_w_activation.1} parent=0 // pred_region
    _
  $region9: #{lin_w_activation.1} parent=0 // pred_fallthru
    _
  // Predicated region
  $region10: #{lin_w_activation.1} parent=0 // pred_check
    _
  $region11: #{lin_w_activation.1} parent=0 // pred_check_branch
    %13 = sbr.rel (0) target = $region13
  $region12: #{lin_w_activation.1} parent=0 // pred_region
    _
  $region13: #{lin_w_activation.1} parent=0 // pred_fallthru
    _
  %p14 = scmp.eq.s32.totalorder 0, 0
  // Predicated region
  $region14: #{lin_w_activation.1} parent=0 // pred_check
    %p15 = pneg %p14
  $region15: #{lin_w_activation.1} parent=0 // pred_check_branch
    %17 = sbr.rel (%p15) target = $region17
  $region16: #{lin_w_activation.1} parent=0 // pred_region
    %18 = vst [vmem:[%s3] sm:$0xff] 0.0
    %19 = vst [vmem:[%s3 + $0x8] sm:$0xff] 0.0
  $region17: #{lin_w_activation.1} parent=0 // pred_fallthru
    _
  %v20 = vld [vmem:[%s3] sm:$0xff]
  %v21 = vld [vmem:[%s3 + $0x8] sm:$0xff]
  %v22 = vld [vmem:[%s0] sm:$0xf]
  %v23 = vld [vmem:[%s0 + $0x4] sm:$0xf]
  %v24 = vld [vmem:[%s1] sm:$0xf]
  %v25 = vld [vmem:[%s1 + $0x4] sm:$0xf]
  %v26 = vld [vmem:[%s1 + $0x8] sm:$0xf]
  %v27 = vld [vmem:[%s1 + $0xc] sm:$0xf]
  %v28 = vld [vmem:[%s1 + $0x10] sm:$0xf]
  %v29 = vld [vmem:[%s1 + $0x14] sm:$0xf]
  %v30 = vld [vmem:[%s1 + $0x18] sm:$0xf]
  %v31 = vld [vmem:[%s1 + $0x1c] sm:$0xf]
  %v32 = vld [vmem:[%s1 + $0x20] sm:$0xf]
  %v33 = vld [vmem:[%s1 + $0x24] sm:$0xf]
  %v34 = vld [vmem:[%s1 + $0x28] sm:$0xf]
  %v35 = vld [vmem:[%s1 + $0x2c] sm:$0xf]
  %v36 = vld [vmem:[%s1 + $0x30] sm:$0xf]
  %v37 = vld [vmem:[%s1 + $0x34] sm:$0xf]
  %v38 = vld [vmem:[%s1 + $0x38] sm:$0xf]
  %v39 = vld [vmem:[%s1 + $0x3c] sm:$0xf]
  %v42 = vunpack.c.l.b16 %v22
  %v43 = vunpack.c.l.b16 %v23
  %v44 = vpack.c.b16 %v43, %v42
  %v62 = vunpack.c.l.b16 %v24
  %v63 = vunpack.c.l.b16 %v25
  %v64 = vunpack.c.l.b16 %v26
  %v65 = vunpack.c.l.b16 %v27
  %v66 = vunpack.c.l.b16 %v28
  %v67 = vunpack.c.l.b16 %v29
  %v68 = vunpack.c.l.b16 %v30
  %v69 = vunpack.c.l.b16 %v31
  %v70 = vunpack.c.l.b16 %v32
  %v71 = vunpack.c.l.b16 %v33
  %v72 = vunpack.c.l.b16 %v34
  %v73 = vunpack.c.l.b16 %v35
  %v74 = vunpack.c.l.b16 %v36
  %v75 = vunpack.c.l.b16 %v37
  %v76 = vunpack.c.l.b16 %v38
  %v77 = vunpack.c.l.b16 %v39
  %v78 = vpack.c.b16 %v63, %v62
  %v79 = vpack.c.b16 %v65, %v64
  %v80 = vpack.c.b16 %v67, %v66
  %v81 = vpack.c.b16 %v69, %v68
  %v82 = vpack.c.b16 %v71, %v70
  %v83 = vpack.c.b16 %v73, %v72
  %v84 = vpack.c.b16 %v75, %v74
  %v85 = vpack.c.b16 %v77, %v76
  %94 = vmatpush.bf16.msra.mxu0 %v85
  %95 = vmatpush.bf16.msra.mxu0 %v84
  %96 = vmatpush.bf16.msra.mxu0 %v83
  %97 = vmatpush.bf16.msra.mxu0 %v82
  %98 = vmatpush.bf16.msra.mxu0 %v81
  %99 = vmatpush.bf16.msra.mxu0 %v80
  %100 = vmatpush.bf16.msra.mxu0 %v79
  %101 = vmatpush.bf16.msra.mxu0 %v78
  %102 = vmatmul.bf16.gmra.mxu0 %v44
  %v103 = vpop.f32.mrf.mxu0
  %v104 = vadd.f32 0.0, %v103
  %v105 = vpop.f32.mrf.mxu0
  %v106 = vadd.f32 0.0, %v105
  %107 = vdwg.mxu0
  %v108 = vadd.f32 %v20, %v104
  %v109 = vadd.f32 %v21, %v106
  %110 = vst [vmem:[%s3] sm:$0xff] %v108
  %111 = vst [vmem:[%s3 + $0x8] sm:$0xff] %v109
  // Predicated region
  $region18: #{lin_w_activation.1} parent=0 // pred_check
    %p112 = pneg %p14
  $region19: #{lin_w_activation.1} parent=0 // pred_check_branch
    %114 = sbr.rel (%p112) target = $region21
  $region20: #{lin_w_activation.1} parent=0 // pred_region
    %v115 = vld [vmem:[%s3] sm:$0xff]
    %v116 = vld [vmem:[%s3 + $0x8] sm:$0xff]
    %v117 = vld [vmem:[%s2] sm:$0x1]
    %v119 = vperm.slane %v117, 0
    %v121 = vadd.f32 %v115, %v119
    %v122 = vadd.f32 %v116, %v119
    %v123 = vmax.f32 %v121, 0.0
    %v124 = vmax.f32 %v122, 0.0
    %125 = vst [vmem:[%s3] sm:$0xff] %v123
    %126 = vst [vmem:[%s3 + $0x8] sm:$0xff] %v124
  $region21: #{lin_w_activation.1} parent=0 // pred_fallthru
    _
  // Predicated region
  $region22: #{lin_w_activation.1} parent=0 // pred_check
    _
  $region23: #{lin_w_activation.1} parent=0 // pred_check_branch
    %128 = sbr.rel (0) target = $region25
  $region24: #{lin_w_activation.1} parent=0 // pred_region
    _
  $region25: #{lin_w_activation.1} parent=0 // pred_fallthru
    _
  // Predicated region
  $region26: #{lin_w_activation.1} parent=0 // pred_check
    _
  $region27: #{lin_w_activation.1} parent=0 // pred_check_branch
    %130 = sbr.rel (0) target = $region29
  $region28: #{lin_w_activation.1} parent=0 // pred_region
    _
  $region29: #{lin_w_activation.1} parent=0 // pred_fallthru
    _

</llo_original>
